<compile_context>
chip_gen: v7x
topology: tpu7x:2x2x1
jax: 0.10.0
libtpu: 0.0.40
codegen_flags: <defaults>
</compile_context>

<pallas_src>
import functools

import jax
import jax.numpy as jnp
from jax.experimental import pallas as pl
from jax.experimental.pallas import tpu as pltpu

_LANES = 128
_SUBLANES = 8
_CHUNK = _SUBLANES * _LANES            # 1024: minimal zero-pad granule
_DEFAULT_TILE_ROWS = 8192              # 8192*128*4B = 4 MiB / input / buffer


def _cdiv(a, b):
    return -(-a // b)


def _rave_loss_kernel(x_ref, xr_ref, mean_ref, logvar_ref, recon_ref, kl_ref,
                      *, block_rows, blocks_per_slice, total_rows,
                      needs_mask, inv_n_kl):
    j = pl.program_id(0)      # slice (parallel; one per TensorCore on v7x)
    k = pl.program_id(1)      # streaming / reduction step within the slice

    @pl.when(k == 0)
    def _init():
        recon_ref[...] = jnp.zeros_like(recon_ref)

    # Sum of squared differences, f32 accumulation.
    d = xr_ref[...].astype(jnp.float32) - x_ref[...].astype(jnp.float32)
    sq = d * d
    if needs_mask:
        # Mask rows beyond the valid (zero-padded-to-1024) row count: covers
        # both the ragged final block and clamped (duplicate) overhang blocks.
        row_start = (j * blocks_per_slice + k) * block_rows
        row_ids = jax.lax.broadcasted_iota(jnp.int32, (block_rows, _LANES), 0)
        sq = jnp.where(row_start + row_ids < total_rows, sq, 0.0)

    # (8,128) vector accumulator: fold the sublane-major axis on the VPU; the
    # single cross-lane/sublane reduce of the partials happens in the wrapper.
    part = sq.reshape(block_rows // _SUBLANES, _SUBLANES, _LANES).sum(axis=0)
    recon_ref[...] += part.reshape(1, _SUBLANES, _LANES)

    @pl.when(k == pl.num_programs(1) - 1)
    def _finalize():
        # KL on the small resident latent blocks (tiny; recomputed per slice
        # so every slice fully defines its own output block -- no races).
        m = mean_ref[...].astype(jnp.float32)
        lv = logvar_ref[...].astype(jnp.float32)
        kl = -0.5 * jnp.sum(1.0 + lv - m * m - jnp.exp(lv)) * inv_n_kl
        kl_ref[...] = jnp.full(kl_ref.shape, kl, jnp.float32)


def _lane_dense(a):
    """Flatten `a` to a lane-dense (rows, 128) slab, rows a multiple of 8.

    Pads with at most 1023 zeros (only when a.size % 1024 != 0); zero padding
    contributes (0-0)^2 = 0 to the recon sum so no extra masking is needed.
    """
    n = a.size
    flat = a.reshape(-1)
    pad = (-n) % _CHUNK
    if pad:
        # TODO(synk): rare full-copy for sizes not a multiple of 1024; could be
        # avoided by summing the <1024-element tail in the wrapper instead.
        flat = jnp.pad(flat, (0, pad))
    return flat.reshape((n + pad) // _LANES, _LANES)


def rave_loss(x, x_recon, mean, log_var, kl_weight: float = 0.01, *,
              tile_rows: int | None = None, num_slices: int = 2):
    """JAX/Pallas equivalent of RAVELoss.forward.

    Args:
      x, x_recon: (B, C, T) arrays (any float dtype; accumulation is f32).
      mean, log_var: (B, L, Tz) latent-statistics arrays (kept VMEM-resident).
      kl_weight: scalar weight of the KL term.
      tile_rows: override of the streaming tile height (rows of 128 lanes).
      num_slices: leading "parallel" grid extent (2 uses both v7x TensorCores;
        harmless / serialized on single-core chips).

    Returns:
      (total_loss, {'total_loss', 'recon_loss', 'kl_loss'}) -- scalar f32.
    """
    max_tile_rows = _DEFAULT_TILE_ROWS if tile_rows is None else tile_rows
    max_tile_rows = max(_SUBLANES, (max_tile_rows // _SUBLANES) * _SUBLANES)

    # Lane-dense slabs for the large recon tensors (no dtype cast in HBM).
    x2 = _lane_dense(x)
    xr2 = _lane_dense(x_recon)
    rows = x2.shape[0]

    # Small latent tensors stay as full-array resident blocks.
    m2 = mean.reshape(mean.shape[0], -1)
    lv2 = log_var.reshape(log_var.shape[0], -1)

    block_rows = min(max_tile_rows, rows)
    total_blocks = _cdiv(rows, block_rows)
    num_slices = max(1, min(int(num_slices), total_blocks))
    bps = _cdiv(total_blocks, num_slices)          # blocks per slice
    even_split = (num_slices * bps == total_blocks)
    needs_mask = (rows % block_rows != 0) or (not even_split)

    if even_split:
        def stream_map(j, k):
            return (j * bps + k, 0)
    else:
        last_blk = total_blocks - 1

        def stream_map(j, k):
            # Clamp overhang blocks in-bounds; the kernel masks them to zero.
            return (jnp.minimum(j * bps + k, last_blk), 0)

    kernel = functools.partial(
        _rave_loss_kernel,
        block_rows=block_rows,
        blocks_per_slice=bps,
        total_rows=rows,
        needs_mask=needs_mask,
        inv_n_kl=1.0 / float(mean.size),
    )

    recon_parts, kl_parts = pl.pallas_call(
        kernel,
        out_shape=(
            jax.ShapeDtypeStruct((num_slices, _SUBLANES, _LANES), jnp.float32),
            jax.ShapeDtypeStruct((num_slices, _SUBLANES, _LANES), jnp.float32),
        ),
        grid=(num_slices, bps),
        in_specs=[
            pl.BlockSpec((block_rows, _LANES), stream_map),
            pl.BlockSpec((block_rows, _LANES), stream_map),
            pl.BlockSpec(m2.shape, lambda j, k: (0, 0)),    # resident
            pl.BlockSpec(lv2.shape, lambda j, k: (0, 0)),   # resident
        ],
        out_specs=(
            pl.BlockSpec((1, _SUBLANES, _LANES), lambda j, k: (j, 0, 0)),
            pl.BlockSpec((1, _SUBLANES, _LANES), lambda j, k: (j, 0, 0)),
        ),
        compiler_params=pltpu.CompilerParams(
            dimension_semantics=("parallel", "arbitrary"),
            vmem_limit_bytes=48 * 1024 * 1024,
        ),
    )(x2, xr2, m2, lv2)

    recon_loss = jnp.sum(recon_parts) * jnp.float32(1.0 / x.size)
    kl_loss = kl_parts[0, 0, 0]
    total_loss = recon_loss + kl_weight * kl_loss
    return total_loss, {
        "total_loss": total_loss,
        "recon_loss": recon_loss,
        "kl_loss": kl_loss,
    }


def _reference(x, x_recon, mean, log_var, kl_weight):
    recon = jnp.mean((x_recon.astype(jnp.float32) - x.astype(jnp.float32)) ** 2)
    kl = -0.5 * jnp.mean(
        1.0 + log_var.astype(jnp.float32)
        - mean.astype(jnp.float32) ** 2
        - jnp.exp(log_var.astype(jnp.float32)))
    return recon + kl_weight * kl, recon, kl


def _check(total, parts, ref_total, ref_recon, ref_kl):
    assert jnp.allclose(parts["recon_loss"], ref_recon, rtol=1e-5, atol=1e-6)
    assert jnp.allclose(parts["kl_loss"], ref_kl, rtol=1e-5, atol=1e-6)
    assert jnp.allclose(total, ref_total, rtol=1e-5, atol=1e-6)


if __name__ == "__main__":
    key = jax.random.PRNGKey(0)
    k1, k2, k3, k4, k5, k6, k7, k8 = jax.random.split(key, 8)

    # Small RAVE-like shapes: audio (B, C, T); latent stats (B, L, Tz).
    B, C, T = 2, 4, 512
    L, Tz = 8, 16
    x = jax.random.normal(k1, (B, C, T), dtype=jnp.float32)
    x_recon = jax.random.normal(k2, (B, C, T), dtype=jnp.float32)
    mean = jax.random.normal(k3, (B, L, Tz), dtype=jnp.float32)
    log_var = 0.1 * jax.random.normal(k4, (B, L, Tz), dtype=jnp.float32)
    kw = 0.01

    ref_total, ref_recon, ref_kl = _reference(x, x_recon, mean, log_var, kw)

    # 1) Default config (single block, single slice for this small input).
    total, parts = rave_loss(x, x_recon, mean, log_var, kl_weight=kw)
    jax.block_until_ready(total)
    _check(total, parts, ref_total, ref_recon, ref_kl)

    # 2) Small tile + two slices: exercises the multi-step accumulation and
    #    the "parallel" leading grid axis (even block split, no masking).
    total2, parts2 = rave_loss(x, x_recon, mean, log_var, kl_weight=kw,
                               tile_rows=8, num_slices=2)
    jax.block_until_ready(total2)
    _check(total2, parts2, ref_total, ref_recon, ref_kl)

    # 3) Element count not a multiple of 128: exercises the small zero-pad.
    T3 = 100
    x3 = jax.random.normal(k5, (B, C, T3), dtype=jnp.float32)
    xr3 = jax.random.normal(k6, (B, C, T3), dtype=jnp.float32)
    ref_total3, ref_recon3, ref_kl3 = _reference(x3, xr3, mean, log_var, kw)
    total3, parts3 = rave_loss(x3, xr3, mean, log_var, kl_weight=kw)
    jax.block_until_ready(total3)
    _check(total3, parts3, ref_total3, ref_recon3, ref_kl3)

    # 4) Ragged last tile + uneven slice split: exercises the in-kernel row
    #    mask and the clamped (overhang) block index path.
    T4 = 640
    x4 = jax.random.normal(k7, (B, C, T4), dtype=jnp.float32)
    xr4 = jax.random.normal(k8, (B, C, T4), dtype=jnp.float32)
    ref_total4, ref_recon4, ref_kl4 = _reference(x4, xr4, mean, log_var, kw)
    total4, parts4 = rave_loss(x4, xr4, mean, log_var, kl_weight=kw,
                               tile_rows=16, num_slices=2)
    jax.block_until_ready(total4)
    _check(total4, parts4, ref_total4, ref_recon4, ref_kl4)

    print("KERNEL_OK")
</pallas_src>

<mosaic_0001>
module attributes {stable_mosaic.version = 11 : i64} {
  func.func @_rave_loss_kernel(%arg0: i32, %arg1: i32, %arg2: memref<32x128xf32, #tpu.memory_space<vmem>>, %arg3: memref<32x128xf32, #tpu.memory_space<vmem>>, %arg4: memref<2x128xf32, #tpu.memory_space<vmem>>, %arg5: memref<2x128xf32, #tpu.memory_space<vmem>>, %arg6: memref<1x8x128xf32, #tpu.memory_space<vmem>>, %arg7: memref<1x8x128xf32, #tpu.memory_space<vmem>>) attributes {dimension_semantics = [#tpu.dimension_semantics<parallel>, #tpu.dimension_semantics<arbitrary>], iteration_bounds = array<i64: 1, 1>, scalar_prefetch = 0 : i64, scratch_operands = 0 : i64, tpu.core_type = #tpu.core_type<tc>, window_params = [{transform_indices = @transform_0, window_bounds = array<i64: 32, 128>}, {transform_indices = @transform_1, window_bounds = array<i64: 32, 128>}, {pipeline_mode = #tpu.pipeline_mode<synchronous>, transform_indices = @transform_2, window_bounds = array<i64: 2, 128>}, {pipeline_mode = #tpu.pipeline_mode<synchronous>, transform_indices = @transform_3, window_bounds = array<i64: 2, 128>}, {transform_indices = @transform_4, window_bounds = array<i64: 1, 8, 128>}, {transform_indices = @transform_5, window_bounds = array<i64: 1, 8, 128>}]} {
    %c0_i32 = arith.constant 0 : i32
    %0 = arith.cmpi eq, %arg1, %c0_i32 : i32
    %1 = arith.extui %0 : i1 to i32
    %c0_i32_0 = arith.constant 0 : i32
    %2 = arith.cmpi ne, %1, %c0_i32_0 : i32
    scf.if %2 {
      %cst_12 = arith.constant 0.000000e+00 : f32
      %16 = vector.broadcast %cst_12 : f32 to vector<1x8x128xf32>
      %c0_13 = arith.constant 0 : index
      %c0_14 = arith.constant 0 : index
      %c0_15 = arith.constant 0 : index
      %17 = vector.load %arg6[%c0_13, %c0_14, %c0_15] : memref<1x8x128xf32, #tpu.memory_space<vmem>>, vector<1x8x128xf32>
      tpu.vector_store %arg6[%c0_13, %c0_14, %c0_15], %16 {strides = array<i32>} : memref<1x8x128xf32, #tpu.memory_space<vmem>>, vector<1x8x128xf32>,
    } else {
    }
    %c0 = arith.constant 0 : index
    %c0_1 = arith.constant 0 : index
    %3 = vector.load %arg3[%c0, %c0_1] : memref<32x128xf32, #tpu.memory_space<vmem>>, vector<32x128xf32>
    %c0_2 = arith.constant 0 : index
    %c0_3 = arith.constant 0 : index
    %4 = vector.load %arg2[%c0_2, %c0_3] : memref<32x128xf32, #tpu.memory_space<vmem>>, vector<32x128xf32>
    %5 = arith.subf %3, %4 : vector<32x128xf32>
    %6 = arith.mulf %5, %5 : vector<32x128xf32>
    %7 = vector.shape_cast %6 : vector<32x128xf32> to vector<4x8x128xf32>
    %cst = arith.constant dense<0.000000e+00> : vector<8x128xf32>
    %8 = vector.multi_reduction <add>, %7, %cst [0] : vector<4x8x128xf32> to vector<8x128xf32>
    %c0_4 = arith.constant 0 : index
    %c0_5 = arith.constant 0 : index
    %c0_6 = arith.constant 0 : index
    %9 = vector.load %arg6[%c0_4, %c0_5, %c0_6] : memref<1x8x128xf32, #tpu.memory_space<vmem>>, vector<1x8x128xf32>
    %10 = vector.shape_cast %8 : vector<8x128xf32> to vector<1x8x128xf32>
    %11 = arith.addf %9, %10 : vector<1x8x128xf32>
    %c0_7 = arith.constant 0 : index
    %c0_8 = arith.constant 0 : index
    %c0_9 = arith.constant 0 : index
    %12 = vector.load %arg6[%c0_7, %c0_8, %c0_9] : memref<1x8x128xf32, #tpu.memory_space<vmem>>, vector<1x8x128xf32>
    tpu.vector_store %arg6[%c0_7, %c0_8, %c0_9], %11 {strides = array<i32>} : memref<1x8x128xf32, #tpu.memory_space<vmem>>, vector<1x8x128xf32>,
    %c0_i32_10 = arith.constant 0 : i32
    %13 = arith.cmpi eq, %arg1, %c0_i32_10 : i32
    %14 = arith.extui %13 : i1 to i32
    %c0_i32_11 = arith.constant 0 : i32
    %15 = arith.cmpi ne, %14, %c0_i32_11 : i32
    scf.if %15 {
      %c0_12 = arith.constant 0 : index
      %c0_13 = arith.constant 0 : index
      %16 = vector.load %arg4[%c0_12, %c0_13] : memref<2x128xf32, #tpu.memory_space<vmem>>, vector<2x128xf32>
      %c0_14 = arith.constant 0 : index
      %c0_15 = arith.constant 0 : index
      %17 = vector.load %arg5[%c0_14, %c0_15] : memref<2x128xf32, #tpu.memory_space<vmem>>, vector<2x128xf32>
      %cst_16 = arith.constant 1.000000e+00 : f32
      %18 = vector.broadcast %cst_16 : f32 to vector<2x128xf32>
      %19 = arith.addf %18, %17 : vector<2x128xf32>
      %20 = arith.mulf %16, %16 : vector<2x128xf32>
      %21 = arith.subf %19, %20 : vector<2x128xf32>
      %22 = math.exp %17 : vector<2x128xf32>
      %23 = arith.subf %21, %22 : vector<2x128xf32>
      %24 = vector.shape_cast %23 : vector<2x128xf32> to vector<1x2x128xf32>
      %cst_17 = arith.constant dense<0.000000e+00> : vector<1xf32>
      %25 = vector.multi_reduction <add>, %24, %cst_17 [1, 2] : vector<1x2x128xf32> to vector<1xf32>
      %26 = vector.shape_cast %25 : vector<1xf32> to vector<1x1x1xf32>
      %27 = vector.extract %26[0, 0, 0] : f32 from vector<1x1x1xf32>
      %cst_18 = arith.constant -5.000000e-01 : f32
      %28 = arith.mulf %cst_18, %27 : f32
      %cst_19 = arith.constant 3.906250e-03 : f32
      %29 = arith.mulf %28, %cst_19 : f32
      %30 = vector.broadcast %29 : f32 to vector<1x8x128xf32>
      %c0_20 = arith.constant 0 : index
      %c0_21 = arith.constant 0 : index
      %c0_22 = arith.constant 0 : index
      %31 = vector.load %arg7[%c0_20, %c0_21, %c0_22] : memref<1x8x128xf32, #tpu.memory_space<vmem>>, vector<1x8x128xf32>
      tpu.vector_store %arg7[%c0_20, %c0_21, %c0_22], %30 {strides = array<i32>} : memref<1x8x128xf32, #tpu.memory_space<vmem>>, vector<1x8x128xf32>,
    } else {
    }
    return
  }
  func.func @transform_0(%arg0: i32, %arg1: i32) -> (i32, i32) {
    %c1_i32 = arith.constant 1 : i32
    %0 = arith.muli %arg0, %c1_i32 : i32
    %1 = arith.addi %0, %arg1 : i32
    %c0_i32 = arith.constant 0 : i32
    %c0_i32_0 = arith.constant 0 : i32
    return %1, %c0_i32 : i32, i32
  }
  func.func @transform_1(%arg0: i32, %arg1: i32) -> (i32, i32) {
    %c1_i32 = arith.constant 1 : i32
    %0 = arith.muli %arg0, %c1_i32 : i32
    %1 = arith.addi %0, %arg1 : i32
    %c0_i32 = arith.constant 0 : i32
    %c0_i32_0 = arith.constant 0 : i32
    return %1, %c0_i32 : i32, i32
  }
  func.func @transform_2(%arg0: i32, %arg1: i32) -> (i32, i32) {
    %c0_i32 = arith.constant 0 : i32
    %c0_i32_0 = arith.constant 0 : i32
    %c0_i32_1 = arith.constant 0 : i32
    return %c0_i32, %c0_i32_0 : i32, i32
  }
  func.func @transform_3(%arg0: i32, %arg1: i32) -> (i32, i32) {
    %c0_i32 = arith.constant 0 : i32
    %c0_i32_0 = arith.constant 0 : i32
    %c0_i32_1 = arith.constant 0 : i32
    return %c0_i32, %c0_i32_0 : i32, i32
  }
  func.func @transform_4(%arg0: i32, %arg1: i32) -> (i32, i32, i32) {
    %c0_i32 = arith.constant 0 : i32
    %c0_i32_0 = arith.constant 0 : i32
    %c0_i32_1 = arith.constant 0 : i32
    return %arg0, %c0_i32, %c0_i32_0 : i32, i32, i32
  }
  func.func @transform_5(%arg0: i32, %arg1: i32) -> (i32, i32, i32) {
    %c0_i32 = arith.constant 0 : i32
    %c0_i32_0 = arith.constant 0 : i32
    %c0_i32_1 = arith.constant 0 : i32
    return %arg0, %c0_i32, %c0_i32_0 : i32, i32, i32
  }
}

</mosaic_0001>

<llo_original>
// kernel: tpu_custom_call.1
$region0: #{tpu_custom_call.1}
  #allocation0 [shape = 'u32[]', space=smem, size = 0x4, offset = 0x4, fixed_abs, tag = 'smem constant byte address 0x4 - core index']
  #allocation1 [shape = 'u32[144,128]{1,0:T(1,128)}', space=vmem, size = 0x12000, scoped, tag = 'internal scratch']
  %s0 = inlined_call_operand.hbm [shape: f32[32,128], index: 0, kind: input, shape index: {}]
  %s1 = inlined_call_operand.hbm [shape: f32[32,128], index: 1, kind: input, shape index: {}]
  %s2 = inlined_call_operand.vmem [shape: f32[2,128], index: 2, kind: input, shape index: {}]
  %s3 = inlined_call_operand.vmem [shape: f32[2,128], index: 3, kind: input, shape index: {}]
  %s4 = inlined_call_operand.hbm [shape: f32[1,8,128], index: 4, kind: output, shape index: {0}]
  %s5 = inlined_call_operand.hbm [shape: f32[1,8,128], index: 5, kind: output, shape index: {1}]
  %6 = xla_tuple %s4, %s5
  %s7 = sld [smem:[#allocation0]]
  $region50: #{tpu_custom_call.1} parent=0
    _
  %s9 = ssub.s32 1, %s7
  %s10 = scalar_select 0, %s9, %s7
  $region1: #{tpu_custom_call.1} parent=0
    #allocation2 [shape = 'u8[16384]{0}', space=vmem, size = 0x4000, scoped, tag = 'input window, operand 0, single buffered']
    #allocation3 [shape = 's32[1]{0}', space=sflag, size = 0x4, scoped, tag = 'scoped memory for tpu_custom_call.1']
    #allocation4 [shape = 's32[1]{0}', space=sflag, size = 0x4, scoped, tag = 'scoped memory for tpu_custom_call.1']
    #allocation5 [shape = 'u8[16384]{0}', space=vmem, size = 0x4000, scoped, tag = 'input window, operand 1, single buffered']
    #allocation6 [shape = 's32[1]{0}', space=sflag, size = 0x4, scoped, tag = 'scoped memory for tpu_custom_call.1']
    #allocation7 [shape = 'u8[4096]{0}', space=vmem, size = 0x1000, scoped, tag = 'output window, operand 0, single buffered']
    #allocation8 [shape = 'u8[4096]{0}', space=vmem, size = 0x1000, scoped, tag = 'output window, operand 1, single buffered']
    #allocation9 [shape = 's32[1]{0}', space=sflag, size = 0x4, scoped, tag = 'scoped memory for tpu_custom_call.1']
    %11 = vsyncpa [#allocation3], 0
    %12 = vsyncpa [#allocation6], 0
    %13 = vsyncpa [#allocation4], 0
    %14 = vsyncpa [#allocation9], 0
    // Predicated region
    $region2: #{tpu_custom_call.1} parent=1 // pred_check
      _
    $region3: #{tpu_custom_call.1} parent=1 // pred_check_branch
      %16 = sbr.rel (0) target = $region5
    $region4: #{tpu_custom_call.1} parent=1 // pred_region
      %s17 = sadd.s32 0, 0
      %s18 = smul.u32 4, %s17
      %s20 = ssub.s32 512, 512
      %21 = vsyncadd [#allocation3], %s20
      %s22 = smul.addr %s18, 128
      %s23 = scalar_lea.hbm %s0, %s22
      %s24 = sshll.u32 [#allocation2], 4
      %s25 = int_to_ptr.vmem [resolvable:$true] %s24
      %30 = dma.hbm_to_vmem [thread:$0]  %s23, 512, %s25, [#allocation3], 128, 128, 8
    $region5: #{tpu_custom_call.1} parent=1 // pred_fallthru
      _
    // Predicated region
    $region6: #{tpu_custom_call.1} parent=1 // pred_check
      _
    $region7: #{tpu_custom_call.1} parent=1 // pred_check_branch
      %32 = sbr.rel (0) target = $region9
    $region8: #{tpu_custom_call.1} parent=1 // pred_region
      %s33 = sadd.s32 0, 0
      %s34 = smul.u32 4, %s33
      %s36 = ssub.s32 512, 512
      %37 = vsyncadd [#allocation6], %s36
      %s38 = smul.addr %s34, 128
      %s39 = scalar_lea.hbm %s1, %s38
      %s40 = sshll.u32 [#allocation5], 4
      %s41 = int_to_ptr.vmem [resolvable:$true] %s40
      %46 = dma.hbm_to_vmem [thread:$0]  %s39, 512, %s41, [#allocation6], 128, 128, 8
    $region9: #{tpu_custom_call.1} parent=1 // pred_fallthru
      _
    // Predicated region
    $region10: #{tpu_custom_call.1} parent=1 // pred_check
      _
    $region11: #{tpu_custom_call.1} parent=1 // pred_check_branch
      %48 = sbr.rel (0) target = $region13
    $region12: #{tpu_custom_call.1} parent=1 // pred_region
      _
    $region13: #{tpu_custom_call.1} parent=1 // pred_fallthru
      _
    // Predicated region
    $region14: #{tpu_custom_call.1} parent=1 // pred_check
      _
    $region15: #{tpu_custom_call.1} parent=1 // pred_check_branch
      %50 = sbr.rel (0) target = $region17
    $region16: #{tpu_custom_call.1} parent=1 // pred_region
      _
    $region17: #{tpu_custom_call.1} parent=1 // pred_fallthru
      _
    // Predicated region
    $region18: #{tpu_custom_call.1} parent=1 // pred_check
      _
    $region19: #{tpu_custom_call.1} parent=1 // pred_check_branch
      %52 = sbr.rel (0) target = $region21
    $region20: #{tpu_custom_call.1} parent=1 // pred_region
      %53 = dma.done [#allocation3], 512
    $region21: #{tpu_custom_call.1} parent=1 // pred_fallthru
      _
    // Predicated region
    $region22: #{tpu_custom_call.1} parent=1 // pred_check
      _
    $region23: #{tpu_custom_call.1} parent=1 // pred_check_branch
      %55 = sbr.rel (0) target = $region25
    $region24: #{tpu_custom_call.1} parent=1 // pred_region
      %56 = dma.done [#allocation6], 512
    $region25: #{tpu_custom_call.1} parent=1 // pred_fallthru
      _
    %s57 = sadd.s32 0, 0
    %s58 = smul.u32 4, %s57
    %s59 = sadd.s32 0, 0
    %s60 = smul.u32 4, %s59
    %p61 = scmp.eq.s32.totalorder 0, 0
    // Predicated region
    $region26: #{tpu_custom_call.1} parent=1 // pred_check
      %p62 = pneg %p61
    $region27: #{tpu_custom_call.1} parent=1 // pred_check_branch
      %64 = sbr.rel (%p62) target = $region29
    $region28: #{tpu_custom_call.1} parent=1 // pred_region
      %65 = vst [vmem:[#allocation7] sm:$0xff] 0.0
    $region29: #{tpu_custom_call.1} parent=1 // pred_fallthru
      _
    %v66 = vld [vmem:[#allocation5] sm:$0xff]
    %v67 = vld [vmem:[#allocation5 + $0x8] sm:$0xff]
    %v68 = vld [vmem:[#allocation5 + $0x10] sm:$0xff]
    %v69 = vld [vmem:[#allocation5 + $0x18] sm:$0xff]
    %v70 = vld [vmem:[#allocation2] sm:$0xff]
    %v71 = vld [vmem:[#allocation2 + $0x8] sm:$0xff]
    %v72 = vld [vmem:[#allocation2 + $0x10] sm:$0xff]
    %v73 = vld [vmem:[#allocation2 + $0x18] sm:$0xff]
    %v74 = vsub.f32 %v66, %v70
    %v75 = vsub.f32 %v67, %v71
    %v76 = vsub.f32 %v68, %v72
    %v77 = vsub.f32 %v69, %v73
    %v78 = vmul.f32 %v74, %v74
    %v79 = vmul.f32 %v75, %v75
    %v80 = vmul.f32 %v76, %v76
    %v81 = vmul.f32 %v77, %v77
    %v82 = vadd.f32 %v78, %v79
    %v83 = vadd.f32 %v82, %v80
    %v84 = vadd.f32 %v83, %v81
    %v85 = vld [vmem:[#allocation7] sm:$0xff]
    %v86 = vadd.f32 %v85, %v84
    %87 = vst [vmem:[#allocation7] sm:$0xff] %v86
    // Predicated region
    $region30: #{tpu_custom_call.1} parent=1 // pred_check
      %p88 = pneg %p61
    $region31: #{tpu_custom_call.1} parent=1 // pred_check_branch
      %90 = sbr.rel (%p88) target = $region33
    $region32: #{tpu_custom_call.1} parent=1 // pred_region
      %v91 = vld [vmem:[%s2] sm:$0x3]
      %v92 = vld [vmem:[%s3] sm:$0x3]
      %v93 = vadd.f32 %v92, 1.0
      %v94 = vmul.f32 %v91, %v91
      %v95 = vsub.f32 %v93, %v94
      %v96 = vmul.f32 %v92, 1.442695
      %v97 = vpow.pop %v96
      %v98 = vsub.f32 %v95, %v97
      %vm99 = vcmask 1041408
      %v100 = vsel %vm99, %v98, 0.0
      %101 = vadd.xlane.f32.xlu0 %v100
      %v102 = vpop.xlane.xlu0 %101
      %v103 = vrot.slane %v102, 4
      %v104 = vadd.f32 %v102, %v103
      %v105 = vrot.slane %v104, 2
      %v106 = vadd.f32 %v104, %v105
      %v107 = vrot.slane %v106, 1
      %v108 = vadd.f32 %v106, %v107
      %s109 = vtos %v108
      %s110 = smul.f32 %s109, -0.5
      %s111 = smul.f32 %s110, 0.00390625
      %v112 = vstv %s111
      %113 = vst [vmem:[#allocation8] sm:$0xff] %v112
    $region33: #{tpu_custom_call.1} parent=1 // pred_fallthru
      _
    // Predicated region
    $region34: #{tpu_custom_call.1} parent=1 // pred_check
      _
    $region35: #{tpu_custom_call.1} parent=1 // pred_check_branch
      %115 = sbr.rel (0) target = $region37
    $region36: #{tpu_custom_call.1} parent=1 // pred_region
      %s117 = ssub.s32 128, 128
      %118 = vsyncadd [#allocation4], %s117
      %s120 = sshll.u32 [#allocation7], 4
      %s121 = int_to_ptr.vmem [resolvable:$true] %s120
      %123 = dma.vmem_to_hbm [thread:$0]  %s121, 128, %s4, [#allocation4]
    $region37: #{tpu_custom_call.1} parent=1 // pred_fallthru
      _
    // Predicated region
    $region38: #{tpu_custom_call.1} parent=1 // pred_check
      _
    $region39: #{tpu_custom_call.1} parent=1 // pred_check_branch
      %125 = sbr.rel (0) target = $region41
    $region40: #{tpu_custom_call.1} parent=1 // pred_region
      %s127 = ssub.s32 128, 128
      %128 = vsyncadd [#allocation9], %s127
      %s130 = sshll.u32 [#allocation8], 4
      %s131 = int_to_ptr.vmem [resolvable:$true] %s130
      %133 = dma.vmem_to_hbm [thread:$0]  %s131, 128, %s5, [#allocation9]
    $region41: #{tpu_custom_call.1} parent=1 // pred_fallthru
      _
    // Predicated region
    $region42: #{tpu_custom_call.1} parent=1 // pred_check
      _
    $region43: #{tpu_custom_call.1} parent=1 // pred_check_branch
      %135 = sbr.rel (0) target = $region45
    $region44: #{tpu_custom_call.1} parent=1 // pred_region
      %136 = dma.done [#allocation4], 128
    $region45: #{tpu_custom_call.1} parent=1 // pred_fallthru
      _
    // Predicated region
    $region46: #{tpu_custom_call.1} parent=1 // pred_check
      _
    $region47: #{tpu_custom_call.1} parent=1 // pred_check_branch
      %138 = sbr.rel (0) target = $region49
    $region48: #{tpu_custom_call.1} parent=1 // pred_region
      %139 = dma.done [#allocation9], 128
    $region49: #{tpu_custom_call.1} parent=1 // pred_fallthru
      _
    %140 = vsyncpa [#allocation3], 1
    %141 = vsyncpa [#allocation6], 1
    %142 = vsyncpa [#allocation4], 1
    %143 = vsyncpa [#allocation9], 1

</llo_original>
